<compile_context>
chip_gen: v5e
topology: v5e:2x2
jax: 0.10.0
libtpu: 0.0.40
codegen_flags: <defaults>
</compile_context>

<pallas_src>
import functools

import jax
import jax.numpy as jnp
from jax import lax
from jax.experimental import pallas as pl
from jax.experimental.pallas import tpu as pltpu


def _round_up(x, m):
    return ((x + m - 1) // m) * m


def _ce_partial_kernel(logits_ref, labels_ref, ce_out_ref, cnt_out_ref,
                       acc_ref, cnt_ref, *, n_rows, block_b, ignore_index):
    core = pl.program_id(0)
    step = pl.program_id(1)
    n_steps = pl.num_programs(1)

    @pl.when(step == 0)
    def _init():
        acc_ref[...] = jnp.zeros_like(acc_ref)
        cnt_ref[...] = jnp.zeros_like(cnt_ref)

    logits = logits_ref[...].astype(jnp.float32)            # [block_b, C]
    labels = labels_ref[...]                                 # [block_b, 1] int32

    # ---- cross entropy on max-shifted logits (log-softmax + NLL) ----
    shifted = logits - jnp.max(logits, axis=-1, keepdims=True)
    lse = jnp.log(jnp.sum(jnp.exp(shifted), axis=-1, keepdims=True))      # [block_b, 1]
    col = lax.broadcasted_iota(jnp.int32, shifted.shape, 1)
    picked = jnp.sum(jnp.where(col == labels, shifted, 0.0),
                     axis=-1, keepdims=True)                              # [block_b, 1]
    per_row = lse - picked                                                # [block_b, 1]

    # ---- validity mask: true rows only (ragged last tile) and not ignore_index ----
    block_idx = core * n_steps + step
    row = block_idx * block_b + lax.broadcasted_iota(jnp.int32, (block_b, 1), 0)
    valid = jnp.logical_and(row < n_rows, labels != ignore_index)

    # jnp.where (not multiply) so Inf/NaN from garbage rows in the ragged tail is dropped.
    acc_ref[...] += jnp.where(valid, per_row, 0.0)
    cnt_ref[...] += jnp.where(valid, 1.0, 0.0)

    @pl.when(step == n_steps - 1)
    def _finalize():
        ce_sum = jnp.sum(acc_ref[...], axis=0, keepdims=True)     # (1, 1)
        n_valid = jnp.sum(cnt_ref[...], axis=0, keepdims=True)    # (1, 1)
        ce_out_ref[...] = jnp.broadcast_to(ce_sum, ce_out_ref.shape)
        cnt_out_ref[...] = jnp.broadcast_to(n_valid, cnt_out_ref.shape)


def logistic_regression_loss(outputs, labels, params, lambd,
                             *, block_b=None, ignore_index=-100):
    """outputs: [B, C] logits, labels: [B] int class indices (or ignore_index),
    params: iterable of model parameter arrays (for the L2 term)."""
    B, C = outputs.shape
    bytes_per_row = 4 * C

    # ---- tile sizing: ~2 MiB logits tile, double-buffered tile <= ~12 MiB ----
    TARGET_TILE_BYTES = 2 << 20
    MAX_TILE_BYTES = 6 << 20
    if block_b is None:
        block_b = max(8, _round_up(TARGET_TILE_BYTES // bytes_per_row, 8))
        block_b = min(block_b, max(8, (MAX_TILE_BYTES // bytes_per_row) // 8 * 8))
    block_b = max(8, _round_up(block_b, 8))
    block_b = min(block_b, _round_up(B, 8))

    n_blocks = pl.cdiv(B, block_b)
    num_cores = 2 if n_blocks >= 2 else 1          # dual-TC partials on v7x
    steps_per_core = pl.cdiv(n_blocks, num_cores)

    labels2d = labels.reshape(B, 1).astype(jnp.int32)

    def _in_map(c, i):
        # Clamp so a grid point past the last block re-reads the last block (its rows
        # are masked out in-kernel via `row < n_rows`).
        return (jnp.minimum(c * steps_per_core + i, n_blocks - 1), 0)

    out_map = lambda c, i: (c, 0, 0)

    # explicit VMEM budget from the tile math (double-buffered inputs + scratch + outputs)
    vmem_needed = (2 * block_b * C * 4            # logits double buffer
                   + 2 * block_b * 4              # labels double buffer
                   + 2 * block_b * 4              # acc/cnt scratch
                   + 4 * 8 * 128 * 4)             # partial outputs
    vmem_limit = min(max(int(vmem_needed * 1.5) + (1 << 20), 4 << 20), 32 << 20)

    cost = pl.CostEstimate(
        flops=int(4 * B * C),
        transcendentals=int(B * C),
        bytes_accessed=int(B * C * 4 + B * 4 + 2 * num_cores * 8 * 128 * 4))

    kernel = functools.partial(
        _ce_partial_kernel,
        n_rows=B, block_b=block_b, ignore_index=ignore_index)

    ce_parts, cnt_parts = pl.pallas_call(
        kernel,
        out_shape=(
            jax.ShapeDtypeStruct((num_cores, 8, 128), jnp.float32),   # per-core CE sum
            jax.ShapeDtypeStruct((num_cores, 8, 128), jnp.float32),   # per-core valid count
        ),
        grid_spec=pltpu.PrefetchScalarGridSpec(
            num_scalar_prefetch=0,
            grid=(num_cores, steps_per_core),
            in_specs=[
                pl.BlockSpec((block_b, C), _in_map),    # logits tile
                pl.BlockSpec((block_b, 1), _in_map),    # labels tile
            ],
            out_specs=[
                pl.BlockSpec((1, 8, 128), out_map),
                pl.BlockSpec((1, 8, 128), out_map),
            ],
            scratch_shapes=[
                pltpu.VMEM((block_b, 1), jnp.float32),  # per-core running CE sum (vector)
                pltpu.VMEM((block_b, 1), jnp.float32),  # per-core running valid count
            ],
        ),
        compiler_params=pltpu.CompilerParams(
            dimension_semantics=("parallel", "arbitrary"),
            vmem_limit_bytes=vmem_limit),
        cost_estimate=cost,
    )(outputs, labels2d)

    ce = jnp.sum(ce_parts[:, 0, 0]) / jnp.sum(cnt_parts[:, 0, 0])

    # L2 regularization over all model parameters, computed with plain XLA (cheap,
    # keeps the kernel free of resident full-array weight blocks).
    l2 = sum(jnp.sum(jnp.square(p.astype(jnp.float32)))
             for p in jax.tree_util.tree_leaves(params))
    return ce + lambd * l2


def _reference_loss(outputs, labels, params, lambd, ignore_index=-100):
    logits = outputs.astype(jnp.float32)
    logp = jax.nn.log_softmax(logits, axis=-1)
    valid = labels != ignore_index
    safe = jnp.where(valid, labels, 0).astype(jnp.int32)
    nll = -jnp.take_along_axis(logp, safe[:, None], axis=-1)[:, 0]
    ce = jnp.sum(jnp.where(valid, nll, 0.0)) / jnp.sum(valid.astype(jnp.float32))
    l2 = sum(jnp.sum(jnp.square(p)) for p in jax.tree_util.tree_leaves(params))
    return ce + lambd * l2


if __name__ == "__main__":
    B, H, C = 60, 32, 128       # batch (not a tile multiple on purpose), hidden, classes
    lambd = 0.01

    key = jax.random.PRNGKey(0)
    k_out, k_lab, k_w, k_b = jax.random.split(key, 4)

    outputs = jax.random.normal(k_out, (B, C), dtype=jnp.float32)        # model logits
    labels = jax.random.randint(k_lab, (B,), 0, C, dtype=jnp.int32)      # class indices
    labels = labels.at[3].set(-100)                                      # exercise ignore_index
    # deterministic "model" parameters for nn.Linear(H, C)
    weight = jax.random.normal(k_w, (C, H), dtype=jnp.float32) * 0.1
    bias = jax.random.normal(k_b, (C,), dtype=jnp.float32) * 0.1
    params = [weight, bias]

    # small explicit tile -> multi-step grid with two "core" slices (ragged last tile)
    loss_small = logistic_regression_loss(outputs, labels, params, lambd, block_b=16)
    # default path -> auto-derived tile size
    loss_auto = logistic_regression_loss(outputs, labels, params, lambd)
    jax.block_until_ready((loss_small, loss_auto))

    ref = _reference_loss(outputs, labels, params, lambd)
    assert jnp.allclose(loss_small, ref, rtol=1e-5, atol=1e-5), (loss_small, ref)
    assert jnp.allclose(loss_auto, ref, rtol=1e-5, atol=1e-5), (loss_auto, ref)

    print("KERNEL_OK")
</pallas_src>

<mosaic_0001>
module attributes {stable_mosaic.version = 11 : i64} {
  func.func @_ce_partial_kernel(%arg0: i32, %arg1: i32, %arg2: memref<16x128xf32, #tpu.memory_space<vmem>>, %arg3: memref<16x1xi32, #tpu.memory_space<vmem>>, %arg4: memref<1x8x128xf32, #tpu.memory_space<vmem>>, %arg5: memref<1x8x128xf32, #tpu.memory_space<vmem>>, %arg6: memref<16x1xf32, #tpu.memory_space<vmem>>, %arg7: memref<16x1xf32, #tpu.memory_space<vmem>>) attributes {dimension_semantics = [#tpu.dimension_semantics<parallel>, #tpu.dimension_semantics<arbitrary>], iteration_bounds = array<i64: 2, 2>, scalar_prefetch = 0 : i64, scratch_operands = 2 : i64, tpu.core_type = #tpu.core_type<tc>, window_params = [{transform_indices = @transform_0, window_bounds = array<i64: 16, 128>}, {transform_indices = @transform_1, window_bounds = array<i64: 16, 1>}, {transform_indices = @transform_2, window_bounds = array<i64: 1, 8, 128>}, {transform_indices = @transform_3, window_bounds = array<i64: 1, 8, 128>}]} {
    %c0_i32 = arith.constant 0 : i32
    %0 = arith.cmpi eq, %arg1, %c0_i32 : i32
    %1 = arith.extui %0 : i1 to i32
    %c0_i32_0 = arith.constant 0 : i32
    %2 = arith.cmpi ne, %1, %c0_i32_0 : i32
    scf.if %2 {
      %cst_19 = arith.constant 0.000000e+00 : f32
      %46 = vector.broadcast %cst_19 : f32 to vector<16x1xf32>
      %c0_20 = arith.constant 0 : index
      %c0_21 = arith.constant 0 : index
      %47 = vector.load %arg6[%c0_20, %c0_21] : memref<16x1xf32, #tpu.memory_space<vmem>>, vector<16x1xf32>
      tpu.vector_store %arg6[%c0_20, %c0_21], %46 {strides = array<i32>} : memref<16x1xf32, #tpu.memory_space<vmem>>, vector<16x1xf32>,
      %cst_22 = arith.constant 0.000000e+00 : f32
      %48 = vector.broadcast %cst_22 : f32 to vector<16x1xf32>
      %c0_23 = arith.constant 0 : index
      %c0_24 = arith.constant 0 : index
      %49 = vector.load %arg7[%c0_23, %c0_24] : memref<16x1xf32, #tpu.memory_space<vmem>>, vector<16x1xf32>
      tpu.vector_store %arg7[%c0_23, %c0_24], %48 {strides = array<i32>} : memref<16x1xf32, #tpu.memory_space<vmem>>, vector<16x1xf32>,
    } else {
    }
    %c0 = arith.constant 0 : index
    %c0_1 = arith.constant 0 : index
    %3 = vector.load %arg2[%c0, %c0_1] : memref<16x128xf32, #tpu.memory_space<vmem>>, vector<16x128xf32>
    %c0_2 = arith.constant 0 : index
    %c0_3 = arith.constant 0 : index
    %4 = vector.load %arg3[%c0_2, %c0_3] : memref<16x1xi32, #tpu.memory_space<vmem>>, vector<16x1xi32>
    %cst = arith.constant dense<0xFF800000> : vector<16xf32>
    %5 = vector.multi_reduction <maximumf>, %3, %cst [1] : vector<16x128xf32> to vector<16xf32>
    %6 = vector.shape_cast %5 : vector<16xf32> to vector<16x1xf32>
    %7 = vector.broadcast %6 : vector<16x1xf32> to vector<16x128xf32>
    %8 = arith.subf %3, %7 : vector<16x128xf32>
    %9 = math.exp %8 : vector<16x128xf32>
    %cst_4 = arith.constant dense<0.000000e+00> : vector<16xf32>
    %10 = vector.multi_reduction <add>, %9, %cst_4 [1] : vector<16x128xf32> to vector<16xf32>
    %11 = vector.shape_cast %10 : vector<16xf32> to vector<16x1xf32>
    %12 = math.log %11 : vector<16x1xf32>
    %13 = tpu.iota {dimensions = array<i32: 1>} : vector<16x128xi32>
    %14 = vector.broadcast %4 : vector<16x1xi32> to vector<16x128xi32>
    %15 = arith.cmpi eq, %13, %14 : vector<16x128xi32>
    %cst_5 = arith.constant 0.000000e+00 : f32
    %16 = vector.broadcast %cst_5 : f32 to vector<16x128xf32>
    %17 = arith.select %15, %8, %16 : vector<16x128xi1>, vector<16x128xf32>
    %cst_6 = arith.constant dense<0.000000e+00> : vector<16xf32>
    %18 = vector.multi_reduction <add>, %17, %cst_6 [1] : vector<16x128xf32> to vector<16xf32>
    %19 = vector.shape_cast %18 : vector<16xf32> to vector<16x1xf32>
    %20 = arith.subf %12, %19 : vector<16x1xf32>
    %c2_i32 = arith.constant 2 : i32
    %21 = arith.muli %arg0, %c2_i32 : i32
    %22 = arith.addi %21, %arg1 : i32
    %c16_i32 = arith.constant 16 : i32
    %23 = arith.muli %22, %c16_i32 : i32
    %24 = tpu.iota {dimensions = array<i32: 0>} : vector<16x1xi32>
    %25 = vector.broadcast %23 : i32 to vector<16x1xi32>
    %26 = arith.addi %25, %24 : vector<16x1xi32>
    %c60_i32 = arith.constant 60 : i32
    %27 = vector.broadcast %c60_i32 : i32 to vector<16x1xi32>
    %28 = arith.cmpi slt, %26, %27 : vector<16x1xi32>
    %c-100_i32 = arith.constant -100 : i32
    %29 = vector.broadcast %c-100_i32 : i32 to vector<16x1xi32>
    %30 = arith.cmpi ne, %4, %29 : vector<16x1xi32>
    %31 = arith.andi %28, %30 : vector<16x1xi1>
    %c0_7 = arith.constant 0 : index
    %c0_8 = arith.constant 0 : index
    %32 = vector.load %arg6[%c0_7, %c0_8] : memref<16x1xf32, #tpu.memory_space<vmem>>, vector<16x1xf32>
    %cst_9 = arith.constant 0.000000e+00 : f32
    %33 = vector.broadcast %cst_9 : f32 to vector<16x1xf32>
    %34 = arith.select %31, %20, %33 : vector<16x1xi1>, vector<16x1xf32>
    %35 = arith.addf %32, %34 : vector<16x1xf32>
    %c0_10 = arith.constant 0 : index
    %c0_11 = arith.constant 0 : index
    %36 = vector.load %arg6[%c0_10, %c0_11] : memref<16x1xf32, #tpu.memory_space<vmem>>, vector<16x1xf32>
    tpu.vector_store %arg6[%c0_10, %c0_11], %35 {strides = array<i32>} : memref<16x1xf32, #tpu.memory_space<vmem>>, vector<16x1xf32>,
    %c0_12 = arith.constant 0 : index
    %c0_13 = arith.constant 0 : index
    %37 = vector.load %arg7[%c0_12, %c0_13] : memref<16x1xf32, #tpu.memory_space<vmem>>, vector<16x1xf32>
    %cst_14 = arith.constant 1.000000e+00 : f32
    %cst_15 = arith.constant 0.000000e+00 : f32
    %38 = vector.broadcast %cst_14 : f32 to vector<16x1xf32>
    %39 = vector.broadcast %cst_15 : f32 to vector<16x1xf32>
    %40 = arith.select %31, %38, %39 : vector<16x1xi1>, vector<16x1xf32>
    %41 = arith.addf %37, %40 : vector<16x1xf32>
    %c0_16 = arith.constant 0 : index
    %c0_17 = arith.constant 0 : index
    %42 = vector.load %arg7[%c0_16, %c0_17] : memref<16x1xf32, #tpu.memory_space<vmem>>, vector<16x1xf32>
    tpu.vector_store %arg7[%c0_16, %c0_17], %41 {strides = array<i32>} : memref<16x1xf32, #tpu.memory_space<vmem>>, vector<16x1xf32>,
    %c1_i32 = arith.constant 1 : i32
    %43 = arith.cmpi eq, %arg1, %c1_i32 : i32
    %44 = arith.extui %43 : i1 to i32
    %c0_i32_18 = arith.constant 0 : i32
    %45 = arith.cmpi ne, %44, %c0_i32_18 : i32
    scf.if %45 {
      %c0_19 = arith.constant 0 : index
      %c0_20 = arith.constant 0 : index
      %46 = vector.load %arg6[%c0_19, %c0_20] : memref<16x1xf32, #tpu.memory_space<vmem>>, vector<16x1xf32>
      %cst_21 = arith.constant dense<0.000000e+00> : vector<1xf32>
      %47 = vector.multi_reduction <add>, %46, %cst_21 [0] : vector<16x1xf32> to vector<1xf32>
      %48 = vector.shape_cast %47 : vector<1xf32> to vector<1x1xf32>
      %c0_22 = arith.constant 0 : index
      %c0_23 = arith.constant 0 : index
      %49 = vector.load %arg7[%c0_22, %c0_23] : memref<16x1xf32, #tpu.memory_space<vmem>>, vector<16x1xf32>
      %cst_24 = arith.constant dense<0.000000e+00> : vector<1xf32>
      %50 = vector.multi_reduction <add>, %49, %cst_24 [0] : vector<16x1xf32> to vector<1xf32>
      %51 = vector.shape_cast %50 : vector<1xf32> to vector<1x1xf32>
      %52 = vector.shape_cast %48 : vector<1x1xf32> to vector<1x1x1xf32>
      %53 = vector.broadcast %52 : vector<1x1x1xf32> to vector<1x8x128xf32>
      %c0_25 = arith.constant 0 : index
      %c0_26 = arith.constant 0 : index
      %c0_27 = arith.constant 0 : index
      %54 = vector.load %arg4[%c0_25, %c0_26, %c0_27] : memref<1x8x128xf32, #tpu.memory_space<vmem>>, vector<1x8x128xf32>
      tpu.vector_store %arg4[%c0_25, %c0_26, %c0_27], %53 {strides = array<i32>} : memref<1x8x128xf32, #tpu.memory_space<vmem>>, vector<1x8x128xf32>,
      %55 = vector.shape_cast %51 : vector<1x1xf32> to vector<1x1x1xf32>
      %56 = vector.broadcast %55 : vector<1x1x1xf32> to vector<1x8x128xf32>
      %c0_28 = arith.constant 0 : index
      %c0_29 = arith.constant 0 : index
      %c0_30 = arith.constant 0 : index
      %57 = vector.load %arg5[%c0_28, %c0_29, %c0_30] : memref<1x8x128xf32, #tpu.memory_space<vmem>>, vector<1x8x128xf32>
      tpu.vector_store %arg5[%c0_28, %c0_29, %c0_30], %56 {strides = array<i32>} : memref<1x8x128xf32, #tpu.memory_space<vmem>>, vector<1x8x128xf32>,
    } else {
    }
    return
  }
  func.func @transform_0(%arg0: i32, %arg1: i32) -> (i32, i32) {
    %c2_i32 = arith.constant 2 : i32
    %0 = arith.muli %arg0, %c2_i32 : i32
    %1 = arith.addi %0, %arg1 : i32
    %c3_i32 = arith.constant 3 : i32
    %2 = arith.minsi %1, %c3_i32 : i32
    %c0_i32 = arith.constant 0 : i32
    %c0_i32_0 = arith.constant 0 : i32
    return %2, %c0_i32 : i32, i32
  }
  func.func @transform_1(%arg0: i32, %arg1: i32) -> (i32, i32) {
    %c2_i32 = arith.constant 2 : i32
    %0 = arith.muli %arg0, %c2_i32 : i32
    %1 = arith.addi %0, %arg1 : i32
    %c3_i32 = arith.constant 3 : i32
    %2 = arith.minsi %1, %c3_i32 : i32
    %c0_i32 = arith.constant 0 : i32
    %c0_i32_0 = arith.constant 0 : i32
    return %2, %c0_i32 : i32, i32
  }
  func.func @transform_2(%arg0: i32, %arg1: i32) -> (i32, i32, i32) {
    %c0_i32 = arith.constant 0 : i32
    %c0_i32_0 = arith.constant 0 : i32
    %c0_i32_1 = arith.constant 0 : i32
    return %arg0, %c0_i32, %c0_i32_0 : i32, i32, i32
  }
  func.func @transform_3(%arg0: i32, %arg1: i32) -> (i32, i32, i32) {
    %c0_i32 = arith.constant 0 : i32
    %c0_i32_0 = arith.constant 0 : i32
    %c0_i32_1 = arith.constant 0 : i32
    return %arg0, %c0_i32, %c0_i32_0 : i32, i32, i32
  }
}

</mosaic_0001>

<llo_original>
// kernel: tpu_custom_call.1
$region0: #{tpu_custom_call.1}
  #allocation0 [shape = 'u32[]', space=smem, size = 0x4, offset = 0x4, fixed_abs, tag = 'smem constant byte address 0x4 - core index']
  #allocation1 [shape = 'u32[72,128]{1,0:T(1,128)}', space=vmem, size = 0x9000, scoped, tag = 'internal scratch']
  #allocation2 [shape = 'f32[16,1]{1,0:T(8,128)}', space=vmem, size = 0x2000, scoped, tag = 'scratch operand']
  #allocation3 [shape = 'f32[16,1]{1,0:T(8,128)}', space=vmem, size = 0x2000, scoped, tag = 'scratch operand']
  %s0 = inlined_call_operand.vmem [shape: f32[60,128], index: 0, kind: input, shape index: {}]
  %s1 = inlined_call_operand.vmem [shape: s32[60,1], index: 1, kind: input, shape index: {}]
  %s2 = inlined_call_operand.hbm [shape: f32[2,8,128], index: 2, kind: output, shape index: {0}]
  %s3 = inlined_call_operand.hbm [shape: f32[2,8,128], index: 3, kind: output, shape index: {1}]
  %4 = xla_tuple %s2, %s3
  %s5 = sld [smem:[#allocation0]]
  $region57: #{tpu_custom_call.1} parent=0
    _
  %s7 = ssub.s32 1, %s5
  %s8 = scalar_select 0, %s7, %s5
  $region1: #{tpu_custom_call.1} parent=0
    #allocation4 [shape = 'u8[8192]{0}', space=vmem, size = 0x2000, scoped, tag = 'output window, operand 0']
    #allocation5 [shape = 's32[2]{0}', space=sflag, size = 0x8, scoped, tag = 'scoped memory for tpu_custom_call.1']
    #allocation6 [shape = 'u8[8192]{0}', space=vmem, size = 0x2000, scoped, tag = 'output window, operand 1']
    #allocation7 [shape = 's32[2]{0}', space=sflag, size = 0x8, scoped, tag = 'scoped memory for tpu_custom_call.1']
    %9 = vsyncpa [#allocation5], 0
    %s10 = scalar_lea.sflag [#allocation5], 1
    %11 = vsyncpa %s10, 0
    %12 = vsyncpa [#allocation7], 0
    %s13 = scalar_lea.sflag [#allocation7], 1
    %14 = vsyncpa %s13, 0
    loop: start=0, step=1, limit=6
    $region2: #{tpu_custom_call.1} parent=1 // loop_pre_header
      _
    $region3: #{tpu_custom_call.1} parent=1 // loop_header
      %s16 = sphi 0, %s20
      %p17 = scmp.ge.s32.totalorder %s16, 6
      %s23 = sphi 0, %s35
      %s24 = sphi 0, %s31
      %s25 = sphi 0, %s23
      %s26 = sphi 0, %s24
      %s27 = sphi 0, %s25
      %s28 = sphi 0, %s26
      %s46 = sphi 0, %s48
      %s49 = sphi 0, %s46
      %s50 = sphi 0, %s49
      %s66 = sphi 0, %s50
      %s80 = sphi 0, %s82
      %s83 = sphi 0, %s80
      %s84 = sphi 0, %s83
      %s100 = sphi 0, %s84
      %s106 = sphi 0, %s108
      %s109 = sphi 0, %s106
      %s110 = sphi 0, %s109
      %s126 = sphi 0, %s110
      %s132 = sphi 0, %s134
      %s135 = sphi 0, %s132
      %s136 = sphi 0, %s135
      %s152 = sphi 0, %s136
    $region4: #{tpu_custom_call.1} parent=1 // loop_header_branch
      %19 = sbr.rel (%p17) target = $region8
    $region5: #{tpu_custom_call.1} parent=1 // loop_body
      %s21 = ssub.s32 %s16, 1
      %s22 = ssub.s32 %s16, 2
      %s29 = sadd.s32 1, %s24
      %p30 = scmp.ge.s32.totalorder %s29, 2
      %s31 = scalar_select %p30, 0, %s29
      %s32 = sadd.s32 1, %s23
      %s33 = scalar_select %p30, %s32, %s23
      %p34 = scmp.ge.s32.totalorder %s33, 2
      %s35 = scalar_select %p34, 0, %s33
      %s36 = smul.u32 %s23, 2
      %s37 = sadd.s32 %s36, %s24
      %p38 = scmp.lt.s32.totalorder %s37, 3
      %s39 = scalar_select %p38, %s37, 3
      %s40 = smul.u32 %s35, 2
      %s41 = sadd.s32 %s40, %s31
      %p42 = scmp.lt.s32.totalorder %s41, 3
      %s43 = scalar_select %p42, %s41, 3
      %s44 = ssub.s32 %s39, %s43
      %p45 = scmp.eq.s32.totalorder %s44, 0
      %s47 = sadd.s32 %s46, 1
      %s48 = scalar_select %p45, %s46, %s47
      %p51 = pneg %p45
      %p52 = scmp.eq.s32.totalorder %s16, 3
      %p53 = por %p51, %p52
      %p54 = scmp.ne.s32.totalorder %s46, %s49
      %p55 = scmp.eq.s32.totalorder %s16, 0
      %p56 = por %p54, %p55
      %p57 = scmp.ne.s32.totalorder %s46, %s49
      %p58 = scmp.eq.s32.totalorder %s21, 3
      %p59 = por %p57, %p58
      %p60 = scmp.ne.s32.totalorder %s49, %s50
      %p61 = scmp.eq.s32.totalorder %s21, 0
      %p62 = por %p60, %p61
      %p63 = scmp.ne.s32.totalorder %s49, %s50
      %p64 = scmp.eq.s32.totalorder %s22, 3
      %p65 = por %p63, %p64
      %p67 = scmp.ne.s32.totalorder %s50, %s66
      %p68 = scmp.eq.s32.totalorder %s22, 0
      %p69 = por %p67, %p68
      %s70 = smul.u32 %s23, 2
      %s71 = sadd.s32 %s70, %s24
      %p72 = scmp.lt.s32.totalorder %s71, 3
      %s73 = scalar_select %p72, %s71, 3
      %s74 = smul.u32 %s35, 2
      %s75 = sadd.s32 %s74, %s31
      %p76 = scmp.lt.s32.totalorder %s75, 3
      %s77 = scalar_select %p76, %s75, 3
      %s78 = ssub.s32 %s73, %s77
      %p79 = scmp.eq.s32.totalorder %s78, 0
      %s81 = sadd.s32 %s80, 1
      %s82 = scalar_select %p79, %s80, %s81
      %p85 = pneg %p79
      %p86 = scmp.eq.s32.totalorder %s16, 3
      %p87 = por %p85, %p86
      %p88 = scmp.ne.s32.totalorder %s80, %s83
      %p89 = scmp.eq.s32.totalorder %s16, 0
      %p90 = por %p88, %p89
      %p91 = scmp.ne.s32.totalorder %s80, %s83
      %p92 = scmp.eq.s32.totalorder %s21, 3
      %p93 = por %p91, %p92
      %p94 = scmp.ne.s32.totalorder %s83, %s84
      %p95 = scmp.eq.s32.totalorder %s21, 0
      %p96 = por %p94, %p95
      %p97 = scmp.ne.s32.totalorder %s83, %s84
      %p98 = scmp.eq.s32.totalorder %s22, 3
      %p99 = por %p97, %p98
      %p101 = scmp.ne.s32.totalorder %s84, %s100
      %p102 = scmp.eq.s32.totalorder %s22, 0
      %p103 = por %p101, %p102
      %s104 = ssub.s32 %s23, %s35
      %p105 = scmp.eq.s32.totalorder %s104, 0
      %s107 = sadd.s32 %s106, 1
      %s108 = scalar_select %p105, %s106, %s107
      %p111 = pneg %p105
      %p112 = scmp.eq.s32.totalorder %s16, 3
      %p113 = por %p111, %p112
      %p114 = scmp.ne.s32.totalorder %s106, %s109
      %p115 = scmp.eq.s32.totalorder %s16, 0
      %p116 = por %p114, %p115
      %p117 = scmp.ne.s32.totalorder %s106, %s109
      %p118 = scmp.eq.s32.totalorder %s21, 3
      %p119 = por %p117, %p118
      %p120 = scmp.ne.s32.totalorder %s109, %s110
      %p121 = scmp.eq.s32.totalorder %s21, 0
      %p122 = por %p120, %p121
      %p123 = scmp.ne.s32.totalorder %s109, %s110
      %p124 = scmp.eq.s32.totalorder %s22, 3
      %p125 = por %p123, %p124
      %p127 = scmp.ne.s32.totalorder %s110, %s126
      %p128 = scmp.eq.s32.totalorder %s22, 0
      %p129 = por %p127, %p128
      %s130 = ssub.s32 %s23, %s35
      %p131 = scmp.eq.s32.totalorder %s130, 0
      %s133 = sadd.s32 %s132, 1
      %s134 = scalar_select %p131, %s132, %s133
      %p137 = pneg %p131
      %p138 = scmp.eq.s32.totalorder %s16, 3
      %p139 = por %p137, %p138
      %p140 = scmp.ne.s32.totalorder %s132, %s135
      %p141 = scmp.eq.s32.totalorder %s16, 0
      %p142 = por %p140, %p141
      %p143 = scmp.ne.s32.totalorder %s132, %s135
      %p144 = scmp.eq.s32.totalorder %s21, 3
      %p145 = por %p143, %p144
      %p146 = scmp.ne.s32.totalorder %s135, %s136
      %p147 = scmp.eq.s32.totalorder %s21, 0
      %p148 = por %p146, %p147
      %p149 = scmp.ne.s32.totalorder %s135, %s136
      %p150 = scmp.eq.s32.totalorder %s22, 3
      %p151 = por %p149, %p150
      %p153 = scmp.ne.s32.totalorder %s136, %s152
      %p154 = scmp.eq.s32.totalorder %s22, 0
      %p155 = por %p153, %p154
      %p156 = scmp.le.s32.totalorder 1, %s16
      %p157 = scmp.lt.s32.totalorder %s16, 5
      %p158 = pnand %p156, %p157
      %p159 = pneg %p158
      // Predicated region
      $region9: #{tpu_custom_call.1} parent=5 // pred_check
        _
      $region10: #{tpu_custom_call.1} parent=5 // pred_check_branch
        %161 = sbr.rel (%p158) target = $region12
      $region11: #{tpu_custom_call.1} parent=5 // pred_region
        %s162 = ssub.s32 %s16, 1
      $region12: #{tpu_custom_call.1} parent=5 // pred_fallthru
        _
      %p163 = scmp.lt.s32.totalorder %s16, 4
      // Predicated region
      $region13: #{tpu_custom_call.1} parent=5 // pred_check
        %p164 = pneg %p163
      $region14: #{tpu_custom_call.1} parent=5 // pred_check_branch
        %166 = sbr.rel (%p164) target = $region16
      $region15: #{tpu_custom_call.1} parent=5 // pred_region
        // Predicated region
        $region17: #{tpu_custom_call.1} parent=15 // pred_check
          %p167 = pneg %p56
        $region18: #{tpu_custom_call.1} parent=15 // pred_check_branch
          %169 = sbr.rel (%p167) target = $region20
        $region19: #{tpu_custom_call.1} parent=15 // pred_region
          %s170 = smul.u32 %s23, 2
          %s171 = sadd.s32 %s170, %s24
          %p172 = scmp.lt.s32.totalorder %s171, 3
          %s173 = scalar_select %p172, %s171, 3
          %s174 = smul.u32 2, %s173
          %p175 = scmp.lt.s32.totalorder %s174, 7
          %s176 = scalar_select %p175, %s174, 7
          %s177 = smul.addr %s176, 8
          %s178 = scalar_lea.vmem %s0, %s177
          %s179 = smul.u32 %s23, 2
          %s180 = sadd.s32 %s179, %s24
          %p181 = scmp.lt.s32.totalorder %s180, 3
          %s182 = scalar_select %p181, %s180, 3
          %s183 = smul.u32 2, %s182
        $region20: #{tpu_custom_call.1} parent=15 // pred_fallthru
          _
        // Predicated region
        $region21: #{tpu_custom_call.1} parent=15 // pred_check
          %p184 = pneg %p90
        $region22: #{tpu_custom_call.1} parent=15 // pred_check_branch
          %186 = sbr.rel (%p184) target = $region24
        $region23: #{tpu_custom_call.1} parent=15 // pred_region
          %s187 = smul.u32 %s23, 2
          %s188 = sadd.s32 %s187, %s24
          %p189 = scmp.lt.s32.totalorder %s188, 3
          %s190 = scalar_select %p189, %s188, 3
          %s191 = smul.u32 2, %s190
          %p192 = scmp.lt.s32.totalorder %s191, 7
          %s193 = scalar_select %p192, %s191, 7
          %s194 = smul.addr %s193, 8
          %s195 = scalar_lea.vmem %s1, %s194
          %s196 = smul.u32 %s23, 2
          %s197 = sadd.s32 %s196, %s24
          %p198 = scmp.lt.s32.totalorder %s197, 3
          %s199 = scalar_select %p198, %s197, 3
          %s200 = smul.u32 2, %s199
        $region24: #{tpu_custom_call.1} parent=15 // pred_fallthru
          _
      $region16: #{tpu_custom_call.1} parent=5 // pred_fallthru
        _
      %p201 = scmp.le.s32.totalorder 1, %s16
      %p202 = scmp.lt.s32.totalorder %s16, 5
      %p203 = pnand %p201, %p202
      %p204 = pneg %p203
      // Predicated region
      $region25: #{tpu_custom_call.1} parent=5 // pred_check
        _
      $region26: #{tpu_custom_call.1} parent=5 // pred_check_branch
        %206 = sbr.rel (%p203) target = $region28
      $region27: #{tpu_custom_call.1} parent=5 // pred_region
        %s207 = ssub.s32 %s16, 1
        %s208 = smul.u32 %s25, 2
        %s209 = sadd.s32 %s208, %s26
        %p210 = scmp.lt.s32.totalorder %s209, 3
        %s211 = scalar_select %p210, %s209, 3
        %s212 = smul.u32 2, %s211
        %p213 = scmp.lt.s32.totalorder %s212, 7
        %s214 = scalar_select %p213, %s212, 7
        %s215 = smul.addr %s214, 8
        %s216 = scalar_lea.vmem %s0, %s215
        %p217 = pneg %p62
        %p218 = pneg %p59
        %s219 = smul.u32 %s25, 2
        %s220 = sadd.s32 %s219, %s26
        %p221 = scmp.lt.s32.totalorder %s220, 3
        %s222 = scalar_select %p221, %s220, 3
        %s223 = smul.u32 2, %s222
        %p224 = scmp.lt.s32.totalorder %s223, 7
        %s225 = scalar_select %p224, %s223, 7
        %s226 = smul.addr %s225, 8
        %s227 = scalar_lea.vmem %s1, %s226
        %p228 = pneg %p96
        %p229 = pneg %p93
        %p230 = pneg %p122
        %p231 = pneg %p119
        %s232 = sand.u32 %s109, 1
        %s233 = scalar_lea.sflag [#allocation5], %s232
        %s234 = sand.u32 %s109, 1
        %s235 = smul.addr %s234, 8
        %s236 = scalar_lea.vmem [#allocation4], %s235
        %p237 = pneg %p148
        %p238 = pneg %p145
        %s239 = sand.u32 %s135, 1
        %s240 = scalar_lea.sflag [#allocation7], %s239
        %s241 = sand.u32 %s135, 1
        %s242 = smul.addr %s241, 8
        %s243 = scalar_lea.vmem [#allocation6], %s242
        %s244 = smul.u32 %s25, 2
        %s245 = sadd.s32 %s244, %s26
        %p246 = scmp.lt.s32.totalorder %s245, 3
        %s247 = scalar_select %p246, %s245, 3
        %s248 = smul.u32 2, %s247
        %p249 = scmp.lt.s32.totalorder %s248, 7
        %s250 = scalar_select %p249, %s248, 7
        %s251 = smul.addr %s250, 8
        %s252 = scalar_lea.vmem %s0, %s251
        %s253 = smul.u32 %s25, 2
        %s254 = sadd.s32 %s253, %s26
        %p255 = scmp.lt.s32.totalorder %s254, 3
        %s256 = scalar_select %p255, %s254, 3
        %s257 = smul.u32 2, %s256
        %s258 = smul.u32 %s25, 2
        %s259 = sadd.s32 %s258, %s26
        %p260 = scmp.lt.s32.totalorder %s259, 3
        %s261 = scalar_select %p260, %s259, 3
        %s262 = smul.u32 2, %s261
        %p263 = scmp.lt.s32.totalorder %s262, 7
        %s264 = scalar_select %p263, %s262, 7
        %s265 = smul.addr %s264, 8
        %s266 = scalar_lea.vmem %s1, %s265
        %s267 = smul.u32 %s25, 2
        %s268 = sadd.s32 %s267, %s26
        %p269 = scmp.lt.s32.totalorder %s268, 3
        %s270 = scalar_select %p269, %s268, 3
        %s271 = smul.u32 2, %s270
        %p272 = scmp.eq.s32.totalorder %s26, 0
        // Predicated region
        $region29: #{tpu_custom_call.1} parent=27 // pred_check
          %p273 = pneg %p272
        $region30: #{tpu_custom_call.1} parent=27 // pred_check_branch
          %275 = sbr.rel (%p273) target = $region32
        $region31: #{tpu_custom_call.1} parent=27 // pred_region
          %vm276 = vcmask 7168
          %277 = vst.msk [vmem:[#allocation2] sm:$0xff] %vm276, 0.0
          %278 = vst.msk [vmem:[#allocation2 + $0x8] sm:$0xff] %vm276, 0.0
          %279 = vst.msk [vmem:[#allocation3] sm:$0xff] %vm276, 0.0
          %280 = vst.msk [vmem:[#allocation3 + $0x8] sm:$0xff] %vm276, 0.0
        $region32: #{tpu_custom_call.1} parent=27 // pred_fallthru
          _
        %v281 = vld [vmem:[%s252] sm:$0xff]
        %v282 = vld [vmem:[%s252 + $0x8] sm:$0xff]
        %v283 = vld [vmem:[%s266] sm:$0xff]
        %v284 = vld [vmem:[%s266 + $0x8] sm:$0xff]
        %285 = vmax.xlane.f32.xlu0 %v281
        %v286 = vpop.xlane.xlu0 %285
        %287 = vmax.xlane.f32.xlu0 %v282
        %v288 = vpop.xlane.xlu0 %287
        %v289 = vsub.f32 %v281, %v286
        %v290 = vsub.f32 %v282, %v288
        %v291 = vmul.f32 %v289, 1.442695
        %v292 = vpow.pop %v291
        %v293 = vmul.f32 %v290, 1.442695
        %v294 = vpow.pop %v293
        %295 = vadd.xlane.f32.xlu0 %v292
        %v296 = vpop.xlane.xlu0 %295
        %297 = vadd.xlane.f32.xlu0 %v294
        %v298 = vpop.xlane.xlu0 %297
        %v299 = vlog2.pop %v296
        %v300 = vmul.f32 %v299, 0.6931472
        %v301 = vlog2.pop %v298
        %v302 = vmul.f32 %v301, 0.6931472
        %v303 = vlaneseq
        %v304 = vand.u32 %v303, 127
        %305 = vset.pattern.permute.xlu0 0
        %306 = vperm.xlu0 %305, %v283
        %v307 = vpop.permute.xlu0 %306
        %308 = vset.pattern.permute.xlu0 0
        %309 = vperm.xlu0 %308, %v284
        %v310 = vpop.permute.xlu0 %309
        %vm311 = vcmp.eq.s32.totalorder %v304, %v307
        %vm312 = vcmp.eq.s32.totalorder %v304, %v310
        %v313 = vsel %vm311, %v289, 0.0
        %v314 = vsel %vm312, %v290, 0.0
        %315 = vadd.xlane.f32.xlu0 %v313
        %v316 = vpop.xlane.xlu0 %315
        %317 = vadd.xlane.f32.xlu0 %v314
        %v318 = vpop.xlane.xlu0 %317
        %v319 = vsub.f32 %v300, %v316
        %v320 = vsub.f32 %v302, %v318
        %s321 = smul.u32 %s25, 2
        %s322 = sadd.s32 %s321, %s26
        %s323 = smul.u32 %s322, 16
        %v324 = vlaneseq
        %v325 = vshrl.u32 %v324, 7
        %v326 = vadd.s32 %v325, 8
        %v327 = vstv %s323
        %v328 = vadd.s32 %v327, %v325
        %v329 = vadd.s32 %v327, %v326
        %vm330 = vcmp.lt.s32.totalorder %v328, 60
        %vm331 = vcmp.lt.s32.totalorder %v329, 60
        %vm332 = vcmp.ne.s32.totalorder %v283, 4294967196
        %vm333 = vcmp.ne.s32.totalorder %v284, 4294967196
        %vm334 = vmand %vm330, %vm332
        %vm335 = vmand %vm331, %vm333
        %v336 = vld [vmem:[#allocation2] sm:$0xff]
        %v337 = vld [vmem:[#allocation2 + $0x8] sm:$0xff]
        %v338 = vsel %vm334, %v319, 0.0
        %v339 = vsel %vm335, %v320, 0.0
        %v340 = vadd.f32 %v336, %v338
        %v341 = vadd.f32 %v337, %v339
        %vm342 = vcmask 7168
        %343 = vst.msk [vmem:[#allocation2] sm:$0xff] %vm342, %v340
        %344 = vst.msk [vmem:[#allocation2 + $0x8] sm:$0xff] %vm342, %v341
        %v345 = vld [vmem:[#allocation3] sm:$0xff]
        %v346 = vld [vmem:[#allocation3 + $0x8] sm:$0xff]
        %v347 = vsel %vm334, 1.0, 0.0
        %v348 = vsel %vm335, 1.0, 0.0
        %v349 = vadd.f32 %v345, %v347
        %v350 = vadd.f32 %v346, %v348
        %351 = vst.msk [vmem:[#allocation3] sm:$0xff] %vm342, %v349
        %352 = vst.msk [vmem:[#allocation3 + $0x8] sm:$0xff] %vm342, %v350
        %p353 = scmp.eq.s32.totalorder %s26, 1
        // Predicated region
        $region33: #{tpu_custom_call.1} parent=27 // pred_check
          %p354 = pneg %p353
        $region34: #{tpu_custom_call.1} parent=27 // pred_check_branch
          %356 = sbr.rel (%p354) target = $region36
        $region35: #{tpu_custom_call.1} parent=27 // pred_region
          %v357 = vld [vmem:[#allocation2] sm:$0xff]
          %v358 = vld [vmem:[#allocation2 + $0x8] sm:$0xff]
          %v359 = vsel %vm342, %v357, 0.0
          %v360 = vsel %vm342, %v358, 0.0
          %v361 = vadd.f32 %v359, %v360
          %v362 = vrot.slane %v361, 4
          %v363 = vadd.f32 %v361, %v362
          %v364 = vrot.slane %v363, 2
          %v365 = vadd.f32 %v363, %v364
          %v366 = vrot.slane %v365, 1
          %v367 = vadd.f32 %v365, %v366
          %v368 = vld [vmem:[#allocation3] sm:$0xff]
          %v369 = vld [vmem:[#allocation3 + $0x8] sm:$0xff]
          %v370 = vsel %vm342, %v368, 0.0
          %v371 = vsel %vm342, %v369, 0.0
          %v372 = vadd.f32 %v370, %v371
          %v373 = vrot.slane %v372, 4
          %v374 = vadd.f32 %v372, %v373
          %v375 = vrot.slane %v374, 2
          %v376 = vadd.f32 %v374, %v375
          %v377 = vrot.slane %v376, 1
          %v378 = vadd.f32 %v376, %v377
          %380 = vset.pattern.permute.xlu0 0
          %381 = vperm.xlu0 %380, %v367
          %v382 = vpop.permute.xlu0 %381
          %384 = vst [vmem:[%s236] sm:$0xff] %v382
          %386 = vset.pattern.permute.xlu0 0
          %387 = vperm.xlu0 %386, %v378
          %v388 = vpop.permute.xlu0 %387
          %390 = vst [vmem:[%s243] sm:$0xff] %v388
        $region36: #{tpu_custom_call.1} parent=27 // pred_fallthru
          _
        %s391 = sand.u32 %s109, 1
        %s392 = scalar_lea.sflag [#allocation5], %s391
        %s393 = sand.u32 %s109, 1
        %s394 = smul.addr %s393, 8
        %s395 = scalar_lea.vmem [#allocation4], %s394
        %s396 = sand.u32 %s135, 1
        %s397 = scalar_lea.sflag [#allocation7], %s396
        %s398 = sand.u32 %s135, 1
        %s399 = smul.addr %s398, 8
        %s400 = scalar_lea.vmem [#allocation6], %s399
        // Predicated region
        $region37: #{tpu_custom_call.1} parent=27 // pred_check
          %p401 = pneg %p119
        $region38: #{tpu_custom_call.1} parent=27 // pred_check_branch
          %403 = sbr.rel (%p401) target = $region40
        $region39: #{tpu_custom_call.1} parent=27 // pred_region
          %405 = vsyncadd %s392, 0
          %s406 = smul.addr %s25, 8
          %s407 = scalar_lea.hbm %s2, %s406
          %s409 = sshll.u32 %s395, 4
          %s410 = int_to_ptr.vmem [resolvable:$true] %s409
          %s411 = sshll.u32 %s407, 4
          %s412 = int_to_ptr.hbm [resolvable:$true] %s411
          %414 = dma.vmem_to_hbm [thread:$0]  %s410, 128, %s412, %s392
        $region40: #{tpu_custom_call.1} parent=27 // pred_fallthru
          _
        // Predicated region
        $region41: #{tpu_custom_call.1} parent=27 // pred_check
          %p415 = pneg %p145
        $region42: #{tpu_custom_call.1} parent=27 // pred_check_branch
          %417 = sbr.rel (%p415) target = $region44
        $region43: #{tpu_custom_call.1} parent=27 // pred_region
          %419 = vsyncadd %s397, 0
          %s420 = smul.addr %s25, 8
          %s421 = scalar_lea.hbm %s3, %s420
          %s423 = sshll.u32 %s400, 4
          %s424 = int_to_ptr.vmem [resolvable:$true] %s423
          %s425 = sshll.u32 %s421, 4
          %s426 = int_to_ptr.hbm [resolvable:$true] %s425
          %428 = dma.vmem_to_hbm [thread:$0]  %s424, 128, %s426, %s397
        $region44: #{tpu_custom_call.1} parent=27 // pred_fallthru
          _
      $region28: #{tpu_custom_call.1} parent=5 // pred_fallthru
        _
      %p429 = scmp.le.s32.totalorder 2, %s16
      // Predicated region
      $region45: #{tpu_custom_call.1} parent=5 // pred_check
        %p430 = pneg %p429
      $region46: #{tpu_custom_call.1} parent=5 // pred_check_branch
        %432 = sbr.rel (%p430) target = $region48
      $region47: #{tpu_custom_call.1} parent=5 // pred_region
        %s433 = ssub.s32 %s16, 2
        // Predicated region
        $region49: #{tpu_custom_call.1} parent=47 // pred_check
          %p434 = pneg %p125
        $region50: #{tpu_custom_call.1} parent=47 // pred_check_branch
          %436 = sbr.rel (%p434) target = $region52
        $region51: #{tpu_custom_call.1} parent=47 // pred_region
          %s437 = sand.u32 %s110, 1
          %s438 = scalar_lea.sflag [#allocation5], %s437
          %s439 = sand.u32 %s110, 1
          %s440 = smul.addr %s439, 8
          %s441 = scalar_lea.vmem [#allocation4], %s440
          %443 = dma.done %s438, 128
        $region52: #{tpu_custom_call.1} parent=47 // pred_fallthru
          _
        // Predicated region
        $region53: #{tpu_custom_call.1} parent=47 // pred_check
          %p444 = pneg %p151
        $region54: #{tpu_custom_call.1} parent=47 // pred_check_branch
          %446 = sbr.rel (%p444) target = $region56
        $region55: #{tpu_custom_call.1} parent=47 // pred_region
          %s447 = sand.u32 %s136, 1
          %s448 = scalar_lea.sflag [#allocation7], %s447
          %s449 = sand.u32 %s136, 1
          %s450 = smul.addr %s449, 8
          %s451 = scalar_lea.vmem [#allocation6], %s450
          %453 = dma.done %s448, 128
        $region56: #{tpu_custom_call.1} parent=47 // pred_fallthru
          _
      $region48: #{tpu_custom_call.1} parent=5 // pred_fallthru
        _
    $region6: #{tpu_custom_call.1} parent=1 // loop_footer
      %s20 = sadd.s32 1, %s16
    $region7: #{tpu_custom_call.1} parent=1 // loop_footer_branch
      %15 = sbr.rel target = $region3
    $region8: #{tpu_custom_call.1} parent=1 // loop_exit
      _
    %454 = vsyncpa [#allocation5], 1
    %s455 = scalar_lea.sflag [#allocation5], 1
    %456 = vsyncpa %s455, 1
    %457 = vsyncpa [#allocation7], 1
    %s458 = scalar_lea.sflag [#allocation7], 1
    %459 = vsyncpa %s458, 1

</llo_original>
